<compile_context>
chip_gen: v5e
topology: v5e:2x2
jax: 0.10.0
libtpu: 0.0.40
codegen_flags: <defaults>
</compile_context>

<pallas_src>
import jax
import jax.numpy as jnp
from jax.experimental import pallas as pl
from jax.experimental.pallas import tpu as pltpu

D_IN, D_HID, D_OUT = 2, 256, 1
_LANE = 128


def _make_kernel(compute_dtype):
    """compute_dtype: dtype for the tanh / intermediate activations (f32 or bf16)."""

    def mlp_kernel(xt_ref, w1t_ref, b1_ref, w2t_ref, b2_ref, w3_ref, b3_ref, o_ref):
        xt = xt_ref[...]                                        # (2, tb) f32
        # fc1 (K=2): a matmul would pad the contraction to a full MXU tile — do it
        # as two lane-dense broadcast multiplies on the VPU (free under fc2's MXU work).
        pre1 = (w1t_ref[:, 0:1] * xt[0:1, :]
                + w1t_ref[:, 1:2] * xt[1:2, :]
                + b1_ref[...])                                  # (256, tb) f32
        h = jnp.tanh(pre1.astype(compute_dtype))                # EUP tanh (bf16 on v6e/v7x)
        # fc2 (256x256): the only real matmul — bf16 operands on the MXU, f32 accum.
        acc = jnp.dot(w2t_ref[...], h.astype(jnp.bfloat16),
                      preferred_element_type=jnp.float32)       # (256, tb) f32
        h2 = jnp.tanh((acc + b2_ref[...]).astype(compute_dtype))
        # fc5 (N=1): (1,256) x (256,tb) MXU row-matmul -> lane-dense (1, tb) output.
        out = jnp.dot(w3_ref[...], h2.astype(jnp.bfloat16),
                      preferred_element_type=jnp.float32) + b3_ref[0, 0]
        o_ref[...] = out.astype(o_ref.dtype)                    # (1, tb)

    return mlp_kernel


def prepare_params(params):
    """One-time, call-hoisted parameter prep (transposes, bf16 casts, reshapes).

    params = (w1, b1, w2, b2, w3, b3) with weights stored (in, out), biases (1, out).
    Returns the kernel-ready tuple.
    """
    w1, b1, w2, b2, w3, b3 = params
    w1t = jnp.asarray(w1, jnp.float32).T                 # (256, 2)   f32
    b1c = jnp.asarray(b1, jnp.float32).reshape(D_HID, 1)  # (256, 1)   f32
    w2t = jnp.asarray(w2, jnp.float32).T.astype(jnp.bfloat16)   # (256, 256) bf16
    b2c = jnp.asarray(b2, jnp.float32).reshape(D_HID, 1)  # (256, 1)   f32
    w3r = jnp.asarray(w3, jnp.float32).reshape(1, D_HID).astype(jnp.bfloat16)  # (1, 256)
    b3s = jnp.asarray(b3, jnp.float32).reshape(1, 1)      # (1, 1) -> SMEM scalar
    return (w1t, b1c, w2t, b2c, w3r, b3s)


def _default_compute_dtype():
    # bf16 VPU/EUP exists on v6e (Trillium) and newer; v5e and older lack it
    # (bf16 there just adds casts).  Unknown chips fall back to f32 (always correct).
    try:
        kind = jax.devices()[0].device_kind.lower()
    except Exception:
        return jnp.float32
    if any(tag in kind for tag in ("v6", "v7", "trillium")):
        return jnp.bfloat16
    return jnp.float32


def u_net_shallow_wide(x, prepared_params, *, tb=2048, compute_dtype=None):
    """Forward pass of u_Net_shallow_wide as a single fused Pallas kernel.

    x: (n, 2) f32.  prepared_params: output of prepare_params().  Returns (n, 1) f32.
    """
    if compute_dtype is None:
        compute_dtype = _default_compute_dtype()
    w1t, b1c, w2t, b2c, w3r, b3s = prepared_params
    n = x.shape[0]

    # Batch tile: lane-dim multiple of 128, big enough to amortize ~0.35us/grid-step,
    # capped so the "parallel" axis has >= 2 steps when the batch allows it (v7x has
    # 2 TensorCores; a single-step grid would leave one idle).
    n_lanes = pl.cdiv(n, _LANE) * _LANE
    tb_eff = max(_LANE, min(int(tb), n_lanes))
    tb_eff -= tb_eff % _LANE
    if n_lanes >= 2 * _LANE and pl.cdiv(n_lanes, tb_eff) < 2:
        tb_eff = max(_LANE, ((n_lanes // 2) // _LANE) * _LANE)
    n_pad = pl.cdiv(n, tb_eff) * tb_eff
    grid = n_pad // tb_eff

    # Lane-dense transposed input (2, n_pad); pad only the (tiny) ragged tail.
    xt = jnp.asarray(x, jnp.float32).T                      # (2, n)
    if n_pad != n:
        xt = jnp.pad(xt, ((0, 0), (0, n_pad - n)))

    full = lambda i: (0, 0)                                 # weights resident across steps
    out_p = pl.pallas_call(
        _make_kernel(compute_dtype),
        out_shape=jax.ShapeDtypeStruct((1, n_pad), jnp.float32),
        grid_spec=pltpu.PrefetchScalarGridSpec(
            num_scalar_prefetch=0,
            grid=(grid,),
            in_specs=[
                pl.BlockSpec((D_IN, tb_eff), lambda i: (0, i)),      # x^T tile (lane-dense)
                pl.BlockSpec((D_HID, D_IN), full),                   # fc1 weight (256, 2)
                pl.BlockSpec((D_HID, 1), full),                      # fc1 bias column
                pl.BlockSpec((D_HID, D_HID), full),                  # fc2 weight^T (bf16)
                pl.BlockSpec((D_HID, 1), full),                      # fc2 bias column
                pl.BlockSpec((1, D_HID), full),                      # fc5 weight row (bf16)
                pl.BlockSpec(memory_space=pltpu.MemorySpace.SMEM),   # fc5 bias scalar
            ],
            out_specs=pl.BlockSpec((1, tb_eff), lambda i: (0, i)),   # lane-dense output row
        ),
        # Working set at tb=2048: ~0.3 MiB of blocks + a few MiB of (256, tb)
        # intermediates — comfortably inside every generation's scoped VMEM
        # (explicitly raised to 32 MiB below, still << v7x's 64 MiB physical).
        compiler_params=pltpu.CompilerParams(
            dimension_semantics=("parallel",),
            vmem_limit_bytes=32 * 1024 * 1024,
        ),
    )(xt, w1t, b1c, w2t, b2c, w3r, b3s)

    out = out_p[0, :n].reshape(n, D_OUT)   # (1, n) -> (n, 1): layout-identical reshape
    return out


def init_params(key):
    """Deterministic init mimicking PyTorch nn.Linear defaults: U(-1/sqrt(fan_in), +1/sqrt(fan_in))."""
    ks = jax.random.split(key, 6)

    def linear(kw, kb, fan_in, fan_out):
        bound = 1.0 / jnp.sqrt(fan_in)
        w = jax.random.uniform(kw, (fan_in, fan_out), jnp.float32, -bound, bound)
        b = jax.random.uniform(kb, (1, fan_out), jnp.float32, -bound, bound)
        return w, b

    w1, b1 = linear(ks[0], ks[1], D_IN, D_HID)
    w2, b2 = linear(ks[2], ks[3], D_HID, D_HID)
    w3, b3 = linear(ks[4], ks[5], D_HID, D_OUT)
    return (w1, b1, w2, b2, w3, b3)


if __name__ == "__main__":
    key = jax.random.PRNGKey(0)
    k_param, k_x = jax.random.split(key)
    params = init_params(k_param)
    prepped = prepare_params(params)          # hoisted: runs once, not per forward
    cdt = _default_compute_dtype()

    n = 128  # batch of (x, y)-like 2-D points
    x = jax.random.normal(k_x, (n, D_IN), jnp.float32)

    out = u_net_shallow_wide(x, prepped, compute_dtype=cdt)
    out = jax.block_until_ready(out)
    assert out.shape == (n, D_OUT)

    w1, b1, w2, b2, w3, b3 = params
    # Reference 1: emulate the kernel's bf16 MXU path (fc2 and fc5 in bf16, f32 accum).
    f32 = jnp.float32
    h1 = jnp.tanh(x @ w1 + b1)
    h1_bf = h1.astype(jnp.bfloat16).astype(f32)
    w2_bf = w2.astype(jnp.bfloat16).astype(f32)
    h2 = jnp.tanh(h1_bf @ w2_bf + b2)
    h2_bf = h2.astype(jnp.bfloat16).astype(f32)
    w3_bf = w3.astype(jnp.bfloat16).astype(f32)
    ref_bf = h2_bf @ w3_bf + b3
    # Reference 2: pure fp32 module forward (loose tolerance, bf16 drift).
    ref_f32 = jnp.tanh(jnp.tanh(x @ w1 + b1) @ w2 + b2) @ w3 + b3

    assert jnp.allclose(out, ref_f32, atol=5e-2), "mismatch vs fp32 reference"
    if cdt == jnp.float32:
        # f32 tanh path: tight check against the bf16-MXU-emulated reference.
        assert jnp.allclose(out, ref_bf, atol=5e-3), "mismatch vs bf16-emulated reference"
    else:
        # bf16 tanh on v6e/v7x adds a little extra (bounded) activation rounding.
        assert jnp.allclose(out, ref_bf, atol=2e-2), "mismatch vs bf16-emulated reference"

    print("KERNEL_OK")
</pallas_src>

<mosaic_0001>
module attributes {stable_mosaic.version = 11 : i64} {
  func.func @mlp_kernel(%arg0: i32, %arg1: memref<2x128xf32, #tpu.memory_space<vmem>>, %arg2: memref<256x2xf32, #tpu.memory_space<vmem>>, %arg3: memref<256x1xf32, #tpu.memory_space<vmem>>, %arg4: memref<256x256xbf16, #tpu.memory_space<vmem>>, %arg5: memref<256x1xf32, #tpu.memory_space<vmem>>, %arg6: memref<1x256xbf16, #tpu.memory_space<vmem>>, %arg7: memref<1x1xf32, #tpu.memory_space<smem>>, %arg8: memref<1x128xf32, #tpu.memory_space<vmem>>) attributes {dimension_semantics = [#tpu.dimension_semantics<parallel>], iteration_bounds = array<i64: 1>, scalar_prefetch = 0 : i64, scratch_operands = 0 : i64, tpu.core_type = #tpu.core_type<tc>, window_params = [{transform_indices = @transform_0, window_bounds = array<i64: 2, 128>}, {pipeline_mode = #tpu.pipeline_mode<synchronous>, transform_indices = @transform_1, window_bounds = array<i64: 256, 2>}, {pipeline_mode = #tpu.pipeline_mode<synchronous>, transform_indices = @transform_2, window_bounds = array<i64: 256, 1>}, {pipeline_mode = #tpu.pipeline_mode<synchronous>, transform_indices = @transform_3, window_bounds = array<i64: 256, 256>}, {pipeline_mode = #tpu.pipeline_mode<synchronous>, transform_indices = @transform_4, window_bounds = array<i64: 256, 1>}, {pipeline_mode = #tpu.pipeline_mode<synchronous>, transform_indices = @transform_5, window_bounds = array<i64: 1, 256>}, {transform_indices = @transform_6, window_bounds = array<i64: 1, 1>}, {transform_indices = @transform_7, window_bounds = array<i64: 1, 128>}]} {
    %c0 = arith.constant 0 : index
    %c0_0 = arith.constant 0 : index
    %0 = vector.load %arg1[%c0, %c0_0] : memref<2x128xf32, #tpu.memory_space<vmem>>, vector<2x128xf32>
    %c0_1 = arith.constant 0 : index
    %c0_2 = arith.constant 0 : index
    %1 = vector.load %arg2[%c0_1, %c0_2] : memref<256x2xf32, #tpu.memory_space<vmem>>, vector<256x1xf32>
    %2 = vector.extract_strided_slice %0 {offsets = [0, 0], sizes = [1, 128], strides = [1, 1]} : vector<2x128xf32> to vector<1x128xf32>
    %3 = vector.broadcast %1 : vector<256x1xf32> to vector<256x128xf32>
    %4 = vector.broadcast %2 : vector<1x128xf32> to vector<256x128xf32>
    %5 = arith.mulf %3, %4 : vector<256x128xf32>
    %c0_3 = arith.constant 0 : index
    %c1 = arith.constant 1 : index
    %6 = vector.load %arg2[%c0_3, %c1] : memref<256x2xf32, #tpu.memory_space<vmem>>, vector<256x1xf32>
    %7 = vector.extract_strided_slice %0 {offsets = [1, 0], sizes = [1, 128], strides = [1, 1]} : vector<2x128xf32> to vector<1x128xf32>
    %8 = vector.broadcast %6 : vector<256x1xf32> to vector<256x128xf32>
    %9 = vector.broadcast %7 : vector<1x128xf32> to vector<256x128xf32>
    %10 = arith.mulf %8, %9 : vector<256x128xf32>
    %11 = arith.addf %5, %10 : vector<256x128xf32>
    %c0_4 = arith.constant 0 : index
    %c0_5 = arith.constant 0 : index
    %12 = vector.load %arg3[%c0_4, %c0_5] : memref<256x1xf32, #tpu.memory_space<vmem>>, vector<256x1xf32>
    %13 = vector.broadcast %12 : vector<256x1xf32> to vector<256x128xf32>
    %14 = arith.addf %11, %13 : vector<256x128xf32>
    %15 = math.tanh %14 : vector<256x128xf32>
    %c0_6 = arith.constant 0 : index
    %c0_7 = arith.constant 0 : index
    %16 = vector.load %arg4[%c0_6, %c0_7] : memref<256x256xbf16, #tpu.memory_space<vmem>>, vector<256x256xbf16>
    %17 = arith.truncf %15 : vector<256x128xf32> to vector<256x128xbf16>
    %cst = arith.constant dense<0.000000e+00> : vector<256x128xf32>
    %18 = tpu.matmul %16, %17, %cst {dimension_numbers = #tpu.dot_dimension_numbers<[1], [0], [0], [1], [0, 0, 1, 1], [], []>} : vector<256x256xbf16>, vector<256x128xbf16>, vector<256x128xf32> -> vector<256x128xf32>
    %c0_8 = arith.constant 0 : index
    %c0_9 = arith.constant 0 : index
    %19 = vector.load %arg5[%c0_8, %c0_9] : memref<256x1xf32, #tpu.memory_space<vmem>>, vector<256x1xf32>
    %20 = vector.broadcast %19 : vector<256x1xf32> to vector<256x128xf32>
    %21 = arith.addf %18, %20 : vector<256x128xf32>
    %22 = math.tanh %21 : vector<256x128xf32>
    %c0_10 = arith.constant 0 : index
    %c0_11 = arith.constant 0 : index
    %23 = vector.load %arg6[%c0_10, %c0_11] : memref<1x256xbf16, #tpu.memory_space<vmem>>, vector<1x256xbf16>
    %24 = arith.truncf %22 : vector<256x128xf32> to vector<256x128xbf16>
    %cst_12 = arith.constant dense<0.000000e+00> : vector<1x128xf32>
    %25 = tpu.matmul %23, %24, %cst_12 {dimension_numbers = #tpu.dot_dimension_numbers<[1], [0], [0], [1], [0, 0, 1, 1], [], []>} : vector<1x256xbf16>, vector<256x128xbf16>, vector<1x128xf32> -> vector<1x128xf32>
    %c0_13 = arith.constant 0 : index
    %c0_14 = arith.constant 0 : index
    %26 = memref.load %arg7[%c0_13, %c0_14] : memref<1x1xf32, #tpu.memory_space<smem>>
    %27 = vector.broadcast %26 : f32 to vector<1x128xf32>
    %28 = arith.addf %25, %27 : vector<1x128xf32>
    %c0_15 = arith.constant 0 : index
    %c0_16 = arith.constant 0 : index
    %29 = vector.load %arg8[%c0_15, %c0_16] : memref<1x128xf32, #tpu.memory_space<vmem>>, vector<1x128xf32>
    tpu.vector_store %arg8[%c0_15, %c0_16], %28 {strides = array<i32>} : memref<1x128xf32, #tpu.memory_space<vmem>>, vector<1x128xf32>,
    return
  }
  func.func @transform_0(%arg0: i32) -> (i32, i32) {
    %c0_i32 = arith.constant 0 : i32
    %c0_i32_0 = arith.constant 0 : i32
    return %c0_i32, %arg0 : i32, i32
  }
  func.func @transform_1(%arg0: i32) -> (i32, i32) {
    %c0_i32 = arith.constant 0 : i32
    %c0_i32_0 = arith.constant 0 : i32
    %c0_i32_1 = arith.constant 0 : i32
    return %c0_i32, %c0_i32_0 : i32, i32
  }
  func.func @transform_2(%arg0: i32) -> (i32, i32) {
    %c0_i32 = arith.constant 0 : i32
    %c0_i32_0 = arith.constant 0 : i32
    %c0_i32_1 = arith.constant 0 : i32
    return %c0_i32, %c0_i32_0 : i32, i32
  }
  func.func @transform_3(%arg0: i32) -> (i32, i32) {
    %c0_i32 = arith.constant 0 : i32
    %c0_i32_0 = arith.constant 0 : i32
    %c0_i32_1 = arith.constant 0 : i32
    return %c0_i32, %c0_i32_0 : i32, i32
  }
  func.func @transform_4(%arg0: i32) -> (i32, i32) {
    %c0_i32 = arith.constant 0 : i32
    %c0_i32_0 = arith.constant 0 : i32
    %c0_i32_1 = arith.constant 0 : i32
    return %c0_i32, %c0_i32_0 : i32, i32
  }
  func.func @transform_5(%arg0: i32) -> (i32, i32) {
    %c0_i32 = arith.constant 0 : i32
    %c0_i32_0 = arith.constant 0 : i32
    %c0_i32_1 = arith.constant 0 : i32
    return %c0_i32, %c0_i32_0 : i32, i32
  }
  func.func @transform_6(%arg0: i32) -> (i32, i32) {
    %c0_i32 = arith.constant 0 : i32
    %c0_i32_0 = arith.constant 0 : i32
    %c0_i32_1 = arith.constant 0 : i32
    return %c0_i32, %c0_i32_0 : i32, i32
  }
  func.func @transform_7(%arg0: i32) -> (i32, i32) {
    %c0_i32 = arith.constant 0 : i32
    %c0_i32_0 = arith.constant 0 : i32
    return %c0_i32, %arg0 : i32, i32
  }
}

</mosaic_0001>

<llo_original>
// kernel: tpu_custom_call.1
$region0: #{tpu_custom_call.1}
  #allocation0 [shape = 'u32[]', space=smem, size = 0x4, offset = 0x4, fixed_abs, tag = 'smem constant byte address 0x4 - core index']
  #allocation1 [shape = 'u32[72,128]{1,0:T(1,128)}', space=vmem, size = 0x9000, scoped, tag = 'internal scratch']
  #allocation2 [shape = 'f32[1,1]{1,0:T(1,128)S(6)}', space=smem, size = 0x200, scoped, tag = 'scoped memory for tpu_custom_call.1']
  %s0 = inlined_call_operand.vmem [shape: f32[2,128], index: 0, kind: input, shape index: {}]
  %s1 = inlined_call_operand.vmem [shape: f32[256,2], index: 1, kind: input, shape index: {}]
  %s2 = inlined_call_operand.vmem [shape: f32[256,1], index: 2, kind: input, shape index: {}]
  %s3 = inlined_call_operand.vmem [shape: bf16[256,256], index: 3, kind: input, shape index: {}]
  %s4 = inlined_call_operand.vmem [shape: f32[256,1], index: 4, kind: input, shape index: {}]
  %s5 = inlined_call_operand.vmem [shape: bf16[1,256], index: 5, kind: input, shape index: {}]
  %s6 = inlined_call_operand.<no memory space> [shape: f32[1,1], index: 6, kind: input, shape index: {}]
  %s7 = inlined_call_operand.hbm [shape: f32[1,128], index: 7, kind: output, shape index: {}]
  %s8 = sld [smem:[#allocation0]]
  $region38: #{tpu_custom_call.1} parent=0
    _
  %s10 = ssub.s32 1, %s8
  %s11 = scalar_select 0, %s10, %s8
  %12 = sst [smem:[#allocation2]] %s6
  $region1: #{tpu_custom_call.1} parent=0
    #allocation3 [shape = 'u8[512]{0}', space=vmem, size = 0x400, scoped, tag = 'output window, operand 0, single buffered']
    #allocation4 [shape = 's32[1]{0}', space=sflag, size = 0x4, scoped, tag = 'scoped memory for tpu_custom_call.1']
    %13 = vsyncpa [#allocation4], 0
    // Predicated region
    $region2: #{tpu_custom_call.1} parent=1 // pred_check
      _
    $region3: #{tpu_custom_call.1} parent=1 // pred_check_branch
      %15 = sbr.rel (0) target = $region5
    $region4: #{tpu_custom_call.1} parent=1 // pred_region
      _
    $region5: #{tpu_custom_call.1} parent=1 // pred_fallthru
      _
    // Predicated region
    $region6: #{tpu_custom_call.1} parent=1 // pred_check
      _
    $region7: #{tpu_custom_call.1} parent=1 // pred_check_branch
      %17 = sbr.rel (0) target = $region9
    $region8: #{tpu_custom_call.1} parent=1 // pred_region
      _
    $region9: #{tpu_custom_call.1} parent=1 // pred_fallthru
      _
    // Predicated region
    $region10: #{tpu_custom_call.1} parent=1 // pred_check
      _
    $region11: #{tpu_custom_call.1} parent=1 // pred_check_branch
      %19 = sbr.rel (0) target = $region13
    $region12: #{tpu_custom_call.1} parent=1 // pred_region
      _
    $region13: #{tpu_custom_call.1} parent=1 // pred_fallthru
      _
    // Predicated region
    $region14: #{tpu_custom_call.1} parent=1 // pred_check
      _
    $region15: #{tpu_custom_call.1} parent=1 // pred_check_branch
      %21 = sbr.rel (0) target = $region17
    $region16: #{tpu_custom_call.1} parent=1 // pred_region
      _
    $region17: #{tpu_custom_call.1} parent=1 // pred_fallthru
      _
    // Predicated region
    $region18: #{tpu_custom_call.1} parent=1 // pred_check
      _
    $region19: #{tpu_custom_call.1} parent=1 // pred_check_branch
      %23 = sbr.rel (0) target = $region21
    $region20: #{tpu_custom_call.1} parent=1 // pred_region
      _
    $region21: #{tpu_custom_call.1} parent=1 // pred_fallthru
      _
    // Predicated region
    $region22: #{tpu_custom_call.1} parent=1 // pred_check
      _
    $region23: #{tpu_custom_call.1} parent=1 // pred_check_branch
      %25 = sbr.rel (0) target = $region25
    $region24: #{tpu_custom_call.1} parent=1 // pred_region
      _
    $region25: #{tpu_custom_call.1} parent=1 // pred_fallthru
      _
    // Predicated region
    $region26: #{tpu_custom_call.1} parent=1 // pred_check
      _
    $region27: #{tpu_custom_call.1} parent=1 // pred_check_branch
      %27 = sbr.rel (0) target = $region29
    $region28: #{tpu_custom_call.1} parent=1 // pred_region
      _
    $region29: #{tpu_custom_call.1} parent=1 // pred_fallthru
      _
    %v28 = vld [vmem:[%s0] sm:$0x3]
    %v29 = vld [vmem:[%s1] sm:$0xff]
    %v30 = vld [vmem:[%s1 + $0x8] sm:$0xff]
    %v31 = vld [vmem:[%s1 + $0x10] sm:$0xff]
    %v32 = vld [vmem:[%s1 + $0x18] sm:$0xff]
    %v33 = vld [vmem:[%s1 + $0x20] sm:$0xff]
    %v34 = vld [vmem:[%s1 + $0x28] sm:$0xff]
    %v35 = vld [vmem:[%s1 + $0x30] sm:$0xff]
    %v36 = vld [vmem:[%s1 + $0x38] sm:$0xff]
    %v37 = vld [vmem:[%s1 + $0x40] sm:$0xff]
    %v38 = vld [vmem:[%s1 + $0x48] sm:$0xff]
    %v39 = vld [vmem:[%s1 + $0x50] sm:$0xff]
    %v40 = vld [vmem:[%s1 + $0x58] sm:$0xff]
    %v41 = vld [vmem:[%s1 + $0x60] sm:$0xff]
    %v42 = vld [vmem:[%s1 + $0x68] sm:$0xff]
    %v43 = vld [vmem:[%s1 + $0x70] sm:$0xff]
    %v44 = vld [vmem:[%s1 + $0x78] sm:$0xff]
    %v45 = vld [vmem:[%s1 + $0x80] sm:$0xff]
    %v46 = vld [vmem:[%s1 + $0x88] sm:$0xff]
    %v47 = vld [vmem:[%s1 + $0x90] sm:$0xff]
    %v48 = vld [vmem:[%s1 + $0x98] sm:$0xff]
    %v49 = vld [vmem:[%s1 + $0xa0] sm:$0xff]
    %v50 = vld [vmem:[%s1 + $0xa8] sm:$0xff]
    %v51 = vld [vmem:[%s1 + $0xb0] sm:$0xff]
    %v52 = vld [vmem:[%s1 + $0xb8] sm:$0xff]
    %v53 = vld [vmem:[%s1 + $0xc0] sm:$0xff]
    %v54 = vld [vmem:[%s1 + $0xc8] sm:$0xff]
    %v55 = vld [vmem:[%s1 + $0xd0] sm:$0xff]
    %v56 = vld [vmem:[%s1 + $0xd8] sm:$0xff]
    %v57 = vld [vmem:[%s1 + $0xe0] sm:$0xff]
    %v58 = vld [vmem:[%s1 + $0xe8] sm:$0xff]
    %v59 = vld [vmem:[%s1 + $0xf0] sm:$0xff]
    %v60 = vld [vmem:[%s1 + $0xf8] sm:$0xff]
    %62 = vset.pattern.permute.xlu0 0
    %63 = vperm.xlu0 %62, %v29
    %v64 = vpop.permute.xlu0 %63
    %67 = vset.pattern.permute.xlu0 0
    %68 = vperm.xlu0 %67, %v30
    %v69 = vpop.permute.xlu0 %68
    %72 = vset.pattern.permute.xlu0 0
    %73 = vperm.xlu0 %72, %v31
    %v74 = vpop.permute.xlu0 %73
    %77 = vset.pattern.permute.xlu0 0
    %78 = vperm.xlu0 %77, %v32
    %v79 = vpop.permute.xlu0 %78
    %82 = vset.pattern.permute.xlu0 0
    %83 = vperm.xlu0 %82, %v33
    %v84 = vpop.permute.xlu0 %83
    %87 = vset.pattern.permute.xlu0 0
    %88 = vperm.xlu0 %87, %v34
    %v89 = vpop.permute.xlu0 %88
    %92 = vset.pattern.permute.xlu0 0
    %93 = vperm.xlu0 %92, %v35
    %v94 = vpop.permute.xlu0 %93
    %97 = vset.pattern.permute.xlu0 0
    %98 = vperm.xlu0 %97, %v36
    %v99 = vpop.permute.xlu0 %98
    %102 = vset.pattern.permute.xlu0 0
    %103 = vperm.xlu0 %102, %v37
    %v104 = vpop.permute.xlu0 %103
    %107 = vset.pattern.permute.xlu0 0
    %108 = vperm.xlu0 %107, %v38
    %v109 = vpop.permute.xlu0 %108
    %112 = vset.pattern.permute.xlu0 0
    %113 = vperm.xlu0 %112, %v39
    %v114 = vpop.permute.xlu0 %113
    %117 = vset.pattern.permute.xlu0 0
    %118 = vperm.xlu0 %117, %v40
    %v119 = vpop.permute.xlu0 %118
    %122 = vset.pattern.permute.xlu0 0
    %123 = vperm.xlu0 %122, %v41
    %v124 = vpop.permute.xlu0 %123
    %127 = vset.pattern.permute.xlu0 0
    %128 = vperm.xlu0 %127, %v42
    %v129 = vpop.permute.xlu0 %128
    %132 = vset.pattern.permute.xlu0 0
    %133 = vperm.xlu0 %132, %v43
    %v134 = vpop.permute.xlu0 %133
    %137 = vset.pattern.permute.xlu0 0
    %138 = vperm.xlu0 %137, %v44
    %v139 = vpop.permute.xlu0 %138
    %142 = vset.pattern.permute.xlu0 0
    %143 = vperm.xlu0 %142, %v45
    %v144 = vpop.permute.xlu0 %143
    %147 = vset.pattern.permute.xlu0 0
    %148 = vperm.xlu0 %147, %v46
    %v149 = vpop.permute.xlu0 %148
    %152 = vset.pattern.permute.xlu0 0
    %153 = vperm.xlu0 %152, %v47
    %v154 = vpop.permute.xlu0 %153
    %157 = vset.pattern.permute.xlu0 0
    %158 = vperm.xlu0 %157, %v48
    %v159 = vpop.permute.xlu0 %158
    %162 = vset.pattern.permute.xlu0 0
    %163 = vperm.xlu0 %162, %v49
    %v164 = vpop.permute.xlu0 %163
    %167 = vset.pattern.permute.xlu0 0
    %168 = vperm.xlu0 %167, %v50
    %v169 = vpop.permute.xlu0 %168
    %172 = vset.pattern.permute.xlu0 0
    %173 = vperm.xlu0 %172, %v51
    %v174 = vpop.permute.xlu0 %173
    %177 = vset.pattern.permute.xlu0 0
    %178 = vperm.xlu0 %177, %v52
    %v179 = vpop.permute.xlu0 %178
    %182 = vset.pattern.permute.xlu0 0
    %183 = vperm.xlu0 %182, %v53
    %v184 = vpop.permute.xlu0 %183
    %187 = vset.pattern.permute.xlu0 0
    %188 = vperm.xlu0 %187, %v54
    %v189 = vpop.permute.xlu0 %188
    %192 = vset.pattern.permute.xlu0 0
    %193 = vperm.xlu0 %192, %v55
    %v194 = vpop.permute.xlu0 %193
    %197 = vset.pattern.permute.xlu0 0
    %198 = vperm.xlu0 %197, %v56
    %v199 = vpop.permute.xlu0 %198
    %202 = vset.pattern.permute.xlu0 0
    %203 = vperm.xlu0 %202, %v57
    %v204 = vpop.permute.xlu0 %203
    %207 = vset.pattern.permute.xlu0 0
    %208 = vperm.xlu0 %207, %v58
    %v209 = vpop.permute.xlu0 %208
    %212 = vset.pattern.permute.xlu0 0
    %213 = vperm.xlu0 %212, %v59
    %v214 = vpop.permute.xlu0 %213
    %217 = vset.pattern.permute.xlu0 0
    %218 = vperm.xlu0 %217, %v60
    %v219 = vpop.permute.xlu0 %218
    %v221 = vperm.slane %v28, 0
    %v222 = vmul.f32 %v64, %v221
    %v223 = vmul.f32 %v69, %v221
    %v224 = vmul.f32 %v74, %v221
    %v225 = vmul.f32 %v79, %v221
    %v226 = vmul.f32 %v84, %v221
    %v227 = vmul.f32 %v89, %v221
    %v228 = vmul.f32 %v94, %v221
    %v229 = vmul.f32 %v99, %v221
    %v230 = vmul.f32 %v104, %v221
    %v231 = vmul.f32 %v109, %v221
    %v232 = vmul.f32 %v114, %v221
    %v233 = vmul.f32 %v119, %v221
    %v234 = vmul.f32 %v124, %v221
    %v235 = vmul.f32 %v129, %v221
    %v236 = vmul.f32 %v134, %v221
    %v237 = vmul.f32 %v139, %v221
    %v238 = vmul.f32 %v144, %v221
    %v239 = vmul.f32 %v149, %v221
    %v240 = vmul.f32 %v154, %v221
    %v241 = vmul.f32 %v159, %v221
    %v242 = vmul.f32 %v164, %v221
    %v243 = vmul.f32 %v169, %v221
    %v244 = vmul.f32 %v174, %v221
    %v245 = vmul.f32 %v179, %v221
    %v246 = vmul.f32 %v184, %v221
    %v247 = vmul.f32 %v189, %v221
    %v248 = vmul.f32 %v194, %v221
    %v249 = vmul.f32 %v199, %v221
    %v250 = vmul.f32 %v204, %v221
    %v251 = vmul.f32 %v209, %v221
    %v252 = vmul.f32 %v214, %v221
    %v253 = vmul.f32 %v219, %v221
    %254 = vset.pattern.permute.xlu0 1
    %255 = vperm.xlu0 %254, %v29
    %v256 = vpop.permute.xlu0 %255
    %258 = vset.pattern.permute.xlu0 1
    %259 = vperm.xlu0 %258, %v30
    %v260 = vpop.permute.xlu0 %259
    %262 = vset.pattern.permute.xlu0 1
    %263 = vperm.xlu0 %262, %v31
    %v264 = vpop.permute.xlu0 %263
    %266 = vset.pattern.permute.xlu0 1
    %267 = vperm.xlu0 %266, %v32
    %v268 = vpop.permute.xlu0 %267
    %270 = vset.pattern.permute.xlu0 1
    %271 = vperm.xlu0 %270, %v33
    %v272 = vpop.permute.xlu0 %271
    %274 = vset.pattern.permute.xlu0 1
    %275 = vperm.xlu0 %274, %v34
    %v276 = vpop.permute.xlu0 %275
    %278 = vset.pattern.permute.xlu0 1
    %279 = vperm.xlu0 %278, %v35
    %v280 = vpop.permute.xlu0 %279
    %282 = vset.pattern.permute.xlu0 1
    %283 = vperm.xlu0 %282, %v36
    %v284 = vpop.permute.xlu0 %283
    %286 = vset.pattern.permute.xlu0 1
    %287 = vperm.xlu0 %286, %v37
    %v288 = vpop.permute.xlu0 %287
    %290 = vset.pattern.permute.xlu0 1
    %291 = vperm.xlu0 %290, %v38
    %v292 = vpop.permute.xlu0 %291
    %294 = vset.pattern.permute.xlu0 1
    %295 = vperm.xlu0 %294, %v39
    %v296 = vpop.permute.xlu0 %295
    %298 = vset.pattern.permute.xlu0 1
    %299 = vperm.xlu0 %298, %v40
    %v300 = vpop.permute.xlu0 %299
    %302 = vset.pattern.permute.xlu0 1
    %303 = vperm.xlu0 %302, %v41
    %v304 = vpop.permute.xlu0 %303
    %306 = vset.pattern.permute.xlu0 1
    %307 = vperm.xlu0 %306, %v42
    %v308 = vpop.permute.xlu0 %307
    %310 = vset.pattern.permute.xlu0 1
    %311 = vperm.xlu0 %310, %v43
    %v312 = vpop.permute.xlu0 %311
    %314 = vset.pattern.permute.xlu0 1
    %315 = vperm.xlu0 %314, %v44
    %v316 = vpop.permute.xlu0 %315
    %318 = vset.pattern.permute.xlu0 1
    %319 = vperm.xlu0 %318, %v45
    %v320 = vpop.permute.xlu0 %319
    %322 = vset.pattern.permute.xlu0 1
    %323 = vperm.xlu0 %322, %v46
    %v324 = vpop.permute.xlu0 %323
    %326 = vset.pattern.permute.xlu0 1
    %327 = vperm.xlu0 %326, %v47
    %v328 = vpop.permute.xlu0 %327
    %330 = vset.pattern.permute.xlu0 1
    %331 = vperm.xlu0 %330, %v48
    %v332 = vpop.permute.xlu0 %331
    %334 = vset.pattern.permute.xlu0 1
    %335 = vperm.xlu0 %334, %v49
    %v336 = vpop.permute.xlu0 %335
    %338 = vset.pattern.permute.xlu0 1
    %339 = vperm.xlu0 %338, %v50
    %v340 = vpop.permute.xlu0 %339
    %342 = vset.pattern.permute.xlu0 1
    %343 = vperm.xlu0 %342, %v51
    %v344 = vpop.permute.xlu0 %343
    %346 = vset.pattern.permute.xlu0 1
    %347 = vperm.xlu0 %346, %v52
    %v348 = vpop.permute.xlu0 %347
    %350 = vset.pattern.permute.xlu0 1
    %351 = vperm.xlu0 %350, %v53
    %v352 = vpop.permute.xlu0 %351
    %354 = vset.pattern.permute.xlu0 1
    %355 = vperm.xlu0 %354, %v54
    %v356 = vpop.permute.xlu0 %355
    %358 = vset.pattern.permute.xlu0 1
    %359 = vperm.xlu0 %358, %v55
    %v360 = vpop.permute.xlu0 %359
    %362 = vset.pattern.permute.xlu0 1
    %363 = vperm.xlu0 %362, %v56
    %v364 = vpop.permute.xlu0 %363
    %366 = vset.pattern.permute.xlu0 1
    %367 = vperm.xlu0 %366, %v57
    %v368 = vpop.permute.xlu0 %367
    %370 = vset.pattern.permute.xlu0 1
    %371 = vperm.xlu0 %370, %v58
    %v372 = vpop.permute.xlu0 %371
    %374 = vset.pattern.permute.xlu0 1
    %375 = vperm.xlu0 %374, %v59
    %v376 = vpop.permute.xlu0 %375
    %378 = vset.pattern.permute.xlu0 1
    %379 = vperm.xlu0 %378, %v60
    %v380 = vpop.permute.xlu0 %379
    %v382 = vperm.slane %v28, 1
    %v383 = vmul.f32 %v256, %v382
    %v384 = vmul.f32 %v260, %v382
    %v385 = vmul.f32 %v264, %v382
    %v386 = vmul.f32 %v268, %v382
    %v387 = vmul.f32 %v272, %v382
    %v388 = vmul.f32 %v276, %v382
    %v389 = vmul.f32 %v280, %v382
    %v390 = vmul.f32 %v284, %v382
    %v391 = vmul.f32 %v288, %v382
    %v392 = vmul.f32 %v292, %v382
    %v393 = vmul.f32 %v296, %v382
    %v394 = vmul.f32 %v300, %v382
    %v395 = vmul.f32 %v304, %v382
    %v396 = vmul.f32 %v308, %v382
    %v397 = vmul.f32 %v312, %v382
    %v398 = vmul.f32 %v316, %v382
    %v399 = vmul.f32 %v320, %v382
    %v400 = vmul.f32 %v324, %v382
    %v401 = vmul.f32 %v328, %v382
    %v402 = vmul.f32 %v332, %v382
    %v403 = vmul.f32 %v336, %v382
    %v404 = vmul.f32 %v340, %v382
    %v405 = vmul.f32 %v344, %v382
    %v406 = vmul.f32 %v348, %v382
    %v407 = vmul.f32 %v352, %v382
    %v408 = vmul.f32 %v356, %v382
    %v409 = vmul.f32 %v360, %v382
    %v410 = vmul.f32 %v364, %v382
    %v411 = vmul.f32 %v368, %v382
    %v412 = vmul.f32 %v372, %v382
    %v413 = vmul.f32 %v376, %v382
    %v414 = vmul.f32 %v380, %v382
    %v415 = vadd.f32 %v222, %v383
    %v416 = vadd.f32 %v223, %v384
    %v417 = vadd.f32 %v224, %v385
    %v418 = vadd.f32 %v225, %v386
    %v419 = vadd.f32 %v226, %v387
    %v420 = vadd.f32 %v227, %v388
    %v421 = vadd.f32 %v228, %v389
    %v422 = vadd.f32 %v229, %v390
    %v423 = vadd.f32 %v230, %v391
    %v424 = vadd.f32 %v231, %v392
    %v425 = vadd.f32 %v232, %v393
    %v426 = vadd.f32 %v233, %v394
    %v427 = vadd.f32 %v234, %v395
    %v428 = vadd.f32 %v235, %v396
    %v429 = vadd.f32 %v236, %v397
    %v430 = vadd.f32 %v237, %v398
    %v431 = vadd.f32 %v238, %v399
    %v432 = vadd.f32 %v239, %v400
    %v433 = vadd.f32 %v240, %v401
    %v434 = vadd.f32 %v241, %v402
    %v435 = vadd.f32 %v242, %v403
    %v436 = vadd.f32 %v243, %v404
    %v437 = vadd.f32 %v244, %v405
    %v438 = vadd.f32 %v245, %v406
    %v439 = vadd.f32 %v246, %v407
    %v440 = vadd.f32 %v247, %v408
    %v441 = vadd.f32 %v248, %v409
    %v442 = vadd.f32 %v249, %v410
    %v443 = vadd.f32 %v250, %v411
    %v444 = vadd.f32 %v251, %v412
    %v445 = vadd.f32 %v252, %v413
    %v446 = vadd.f32 %v253, %v414
    %v447 = vld [vmem:[%s2] sm:$0xff]
    %v448 = vld [vmem:[%s2 + $0x8] sm:$0xff]
    %v449 = vld [vmem:[%s2 + $0x10] sm:$0xff]
    %v450 = vld [vmem:[%s2 + $0x18] sm:$0xff]
    %v451 = vld [vmem:[%s2 + $0x20] sm:$0xff]
    %v452 = vld [vmem:[%s2 + $0x28] sm:$0xff]
    %v453 = vld [vmem:[%s2 + $0x30] sm:$0xff]
    %v454 = vld [vmem:[%s2 + $0x38] sm:$0xff]
    %v455 = vld [vmem:[%s2 + $0x40] sm:$0xff]
    %v456 = vld [vmem:[%s2 + $0x48] sm:$0xff]
    %v457 = vld [vmem:[%s2 + $0x50] sm:$0xff]
    %v458 = vld [vmem:[%s2 + $0x58] sm:$0xff]
    %v459 = vld [vmem:[%s2 + $0x60] sm:$0xff]
    %v460 = vld [vmem:[%s2 + $0x68] sm:$0xff]
    %v461 = vld [vmem:[%s2 + $0x70] sm:$0xff]
    %v462 = vld [vmem:[%s2 + $0x78] sm:$0xff]
    %v463 = vld [vmem:[%s2 + $0x80] sm:$0xff]
    %v464 = vld [vmem:[%s2 + $0x88] sm:$0xff]
    %v465 = vld [vmem:[%s2 + $0x90] sm:$0xff]
    %v466 = vld [vmem:[%s2 + $0x98] sm:$0xff]
    %v467 = vld [vmem:[%s2 + $0xa0] sm:$0xff]
    %v468 = vld [vmem:[%s2 + $0xa8] sm:$0xff]
    %v469 = vld [vmem:[%s2 + $0xb0] sm:$0xff]
    %v470 = vld [vmem:[%s2 + $0xb8] sm:$0xff]
    %v471 = vld [vmem:[%s2 + $0xc0] sm:$0xff]
    %v472 = vld [vmem:[%s2 + $0xc8] sm:$0xff]
    %v473 = vld [vmem:[%s2 + $0xd0] sm:$0xff]
    %v474 = vld [vmem:[%s2 + $0xd8] sm:$0xff]
    %v475 = vld [vmem:[%s2 + $0xe0] sm:$0xff]
    %v476 = vld [vmem:[%s2 + $0xe8] sm:$0xff]
    %v477 = vld [vmem:[%s2 + $0xf0] sm:$0xff]
    %v478 = vld [vmem:[%s2 + $0xf8] sm:$0xff]
    %480 = vset.pattern.permute.xlu0 0
    %481 = vperm.xlu0 %480, %v447
    %v482 = vpop.permute.xlu0 %481
    %485 = vset.pattern.permute.xlu0 0
    %486 = vperm.xlu0 %485, %v448
    %v487 = vpop.permute.xlu0 %486
    %490 = vset.pattern.permute.xlu0 0
    %491 = vperm.xlu0 %490, %v449
    %v492 = vpop.permute.xlu0 %491
    %495 = vset.pattern.permute.xlu0 0
    %496 = vperm.xlu0 %495, %v450
    %v497 = vpop.permute.xlu0 %496
    %500 = vset.pattern.permute.xlu0 0
    %501 = vperm.xlu0 %500, %v451
    %v502 = vpop.permute.xlu0 %501
    %505 = vset.pattern.permute.xlu0 0
    %506 = vperm.xlu0 %505, %v452
    %v507 = vpop.permute.xlu0 %506
    %510 = vset.pattern.permute.xlu0 0
    %511 = vperm.xlu0 %510, %v453
    %v512 = vpop.permute.xlu0 %511
    %515 = vset.pattern.permute.xlu0 0
    %516 = vperm.xlu0 %515, %v454
    %v517 = vpop.permute.xlu0 %516
    %520 = vset.pattern.permute.xlu0 0
    %521 = vperm.xlu0 %520, %v455
    %v522 = vpop.permute.xlu0 %521
    %525 = vset.pattern.permute.xlu0 0
    %526 = vperm.xlu0 %525, %v456
    %v527 = vpop.permute.xlu0 %526
    %530 = vset.pattern.permute.xlu0 0
    %531 = vperm.xlu0 %530, %v457
    %v532 = vpop.permute.xlu0 %531
    %535 = vset.pattern.permute.xlu0 0
    %536 = vperm.xlu0 %535, %v458
    %v537 = vpop.permute.xlu0 %536
    %540 = vset.pattern.permute.xlu0 0
    %541 = vperm.xlu0 %540, %v459
    %v542 = vpop.permute.xlu0 %541
    %545 = vset.pattern.permute.xlu0 0
    %546 = vperm.xlu0 %545, %v460
    %v547 = vpop.permute.xlu0 %546
    %550 = vset.pattern.permute.xlu0 0
    %551 = vperm.xlu0 %550, %v461
    %v552 = vpop.permute.xlu0 %551
    %555 = vset.pattern.permute.xlu0 0
    %556 = vperm.xlu0 %555, %v462
    %v557 = vpop.permute.xlu0 %556
    %560 = vset.pattern.permute.xlu0 0
    %561 = vperm.xlu0 %560, %v463
    %v562 = vpop.permute.xlu0 %561
    %565 = vset.pattern.permute.xlu0 0
    %566 = vperm.xlu0 %565, %v464
    %v567 = vpop.permute.xlu0 %566
    %570 = vset.pattern.permute.xlu0 0
    %571 = vperm.xlu0 %570, %v465
    %v572 = vpop.permute.xlu0 %571
    %575 = vset.pattern.permute.xlu0 0
    %576 = vperm.xlu0 %575, %v466
    %v577 = vpop.permute.xlu0 %576
    %580 = vset.pattern.permute.xlu0 0
    %581 = vperm.xlu0 %580, %v467
    %v582 = vpop.permute.xlu0 %581
    %585 = vset.pattern.permute.xlu0 0
    %586 = vperm.xlu0 %585, %v468
    %v587 = vpop.permute.xlu0 %586
    %590 = vset.pattern.permute.xlu0 0
    %591 = vperm.xlu0 %590, %v469
    %v592 = vpop.permute.xlu0 %591
    %595 = vset.pattern.permute.xlu0 0
    %596 = vperm.xlu0 %595, %v470
    %v597 = vpop.permute.xlu0 %596
    %600 = vset.pattern.permute.xlu0 0
    %601 = vperm.xlu0 %600, %v471
    %v602 = vpop.permute.xlu0 %601
    %605 = vset.pattern.permute.xlu0 0
    %606 = vperm.xlu0 %605, %v472
    %v607 = vpop.permute.xlu0 %606
    %610 = vset.pattern.permute.xlu0 0
    %611 = vperm.xlu0 %610, %v473
    %v612 = vpop.permute.xlu0 %611
    %615 = vset.pattern.permute.xlu0 0
    %616 = vperm.xlu0 %615, %v474
    %v617 = vpop.permute.xlu0 %616
    %620 = vset.pattern.permute.xlu0 0
    %621 = vperm.xlu0 %620, %v475
    %v622 = vpop.permute.xlu0 %621
    %625 = vset.pattern.permute.xlu0 0
    %626 = vperm.xlu0 %625, %v476
    %v627 = vpop.permute.xlu0 %626
    %630 = vset.pattern.permute.xlu0 0
    %631 = vperm.xlu0 %630, %v477
    %v632 = vpop.permute.xlu0 %631
    %635 = vset.pattern.permute.xlu0 0
    %636 = vperm.xlu0 %635, %v478
    %v637 = vpop.permute.xlu0 %636
    %v639 = vadd.f32 %v415, %v482
    %v640 = vadd.f32 %v416, %v487
    %v641 = vadd.f32 %v417, %v492
    %v642 = vadd.f32 %v418, %v497
    %v643 = vadd.f32 %v419, %v502
    %v644 = vadd.f32 %v420, %v507
    %v645 = vadd.f32 %v421, %v512
    %v646 = vadd.f32 %v422, %v517
    %v647 = vadd.f32 %v423, %v522
    %v648 = vadd.f32 %v424, %v527
    %v649 = vadd.f32 %v425, %v532
    %v650 = vadd.f32 %v426, %v537
    %v651 = vadd.f32 %v427, %v542
    %v652 = vadd.f32 %v428, %v547
    %v653 = vadd.f32 %v429, %v552
    %v654 = vadd.f32 %v430, %v557
    %v655 = vadd.f32 %v431, %v562
    %v656 = vadd.f32 %v432, %v567
    %v657 = vadd.f32 %v433, %v572
    %v658 = vadd.f32 %v434, %v577
    %v659 = vadd.f32 %v435, %v582
    %v660 = vadd.f32 %v436, %v587
    %v661 = vadd.f32 %v437, %v592
    %v662 = vadd.f32 %v438, %v597
    %v663 = vadd.f32 %v439, %v602
    %v664 = vadd.f32 %v440, %v607
    %v665 = vadd.f32 %v441, %v612
    %v666 = vadd.f32 %v442, %v617
    %v667 = vadd.f32 %v443, %v622
    %v668 = vadd.f32 %v444, %v627
    %v669 = vadd.f32 %v445, %v632
    %v670 = vadd.f32 %v446, %v637
    %v671 = vtanh.pop %v639
    %v672 = vtanh.pop %v640
    %v673 = vtanh.pop %v641
    %v674 = vtanh.pop %v642
    %v675 = vtanh.pop %v643
    %v676 = vtanh.pop %v644
    %v677 = vtanh.pop %v645
    %v678 = vtanh.pop %v646
    %v679 = vtanh.pop %v647
    %v680 = vtanh.pop %v648
    %v681 = vtanh.pop %v649
    %v682 = vtanh.pop %v650
    %v683 = vtanh.pop %v651
    %v684 = vtanh.pop %v652
    %v685 = vtanh.pop %v653
    %v686 = vtanh.pop %v654
    %v687 = vtanh.pop %v655
    %v688 = vtanh.pop %v656
    %v689 = vtanh.pop %v657
    %v690 = vtanh.pop %v658
    %v691 = vtanh.pop %v659
    %v692 = vtanh.pop %v660
    %v693 = vtanh.pop %v661
    %v694 = vtanh.pop %v662
    %v695 = vtanh.pop %v663
    %v696 = vtanh.pop %v664
    %v697 = vtanh.pop %v665
    %v698 = vtanh.pop %v666
    %v699 = vtanh.pop %v667
    %v700 = vtanh.pop %v668
    %v701 = vtanh.pop %v669
    %v702 = vtanh.pop %v670
    %v703 = vld [vmem:[%s3] sm:$0xff]
    %v704 = vld [vmem:[%s3 + $0x8] sm:$0xff]
    %v705 = vld [vmem:[%s3 + $0x10] sm:$0xff]
    %v706 = vld [vmem:[%s3 + $0x18] sm:$0xff]
    %v707 = vld [vmem:[%s3 + $0x20] sm:$0xff]
    %v708 = vld [vmem:[%s3 + $0x28] sm:$0xff]
    %v709 = vld [vmem:[%s3 + $0x30] sm:$0xff]
    %v710 = vld [vmem:[%s3 + $0x38] sm:$0xff]
    %v711 = vld [vmem:[%s3 + $0x40] sm:$0xff]
    %v712 = vld [vmem:[%s3 + $0x48] sm:$0xff]
    %v713 = vld [vmem:[%s3 + $0x50] sm:$0xff]
    %v714 = vld [vmem:[%s3 + $0x58] sm:$0xff]
    %v715 = vld [vmem:[%s3 + $0x60] sm:$0xff]
    %v716 = vld [vmem:[%s3 + $0x68] sm:$0xff]
    %v717 = vld [vmem:[%s3 + $0x70] sm:$0xff]
    %v718 = vld [vmem:[%s3 + $0x78] sm:$0xff]
    %v719 = vld [vmem:[%s3 + $0x80] sm:$0xff]
    %v720 = vld [vmem:[%s3 + $0x88] sm:$0xff]
    %v721 = vld [vmem:[%s3 + $0x90] sm:$0xff]
    %v722 = vld [vmem:[%s3 + $0x98] sm:$0xff]
    %v723 = vld [vmem:[%s3 + $0xa0] sm:$0xff]
    %v724 = vld [vmem:[%s3 + $0xa8] sm:$0xff]
    %v725 = vld [vmem:[%s3 + $0xb0] sm:$0xff]
    %v726 = vld [vmem:[%s3 + $0xb8] sm:$0xff]
    %v727 = vld [vmem:[%s3 + $0xc0] sm:$0xff]
    %v728 = vld [vmem:[%s3 + $0xc8] sm:$0xff]
    %v729 = vld [vmem:[%s3 + $0xd0] sm:$0xff]
    %v730 = vld [vmem:[%s3 + $0xd8] sm:$0xff]
    %v731 = vld [vmem:[%s3 + $0xe0] sm:$0xff]
    %v732 = vld [vmem:[%s3 + $0xe8] sm:$0xff]
    %v733 = vld [vmem:[%s3 + $0xf0] sm:$0xff]
    %v734 = vld [vmem:[%s3 + $0xf8] sm:$0xff]
    %v735 = vpack.c.bf16 %v672, %v671
    %v736 = vpack.c.bf16 %v674, %v673
    %v737 = vpack.c.bf16 %v676, %v675
    %v738 = vpack.c.bf16 %v678, %v677
    %v739 = vpack.c.bf16 %v680, %v679
    %v740 = vpack.c.bf16 %v682, %v681
    %v741 = vpack.c.bf16 %v684, %v683
    %v742 = vpack.c.bf16 %v686, %v685
    %v743 = vpack.c.bf16 %v688, %v687
    %v744 = vpack.c.bf16 %v690, %v689
    %v745 = vpack.c.bf16 %v692, %v691
    %v746 = vpack.c.bf16 %v694, %v693
    %v747 = vpack.c.bf16 %v696, %v695
    %v748 = vpack.c.bf16 %v698, %v697
    %v749 = vpack.c.bf16 %v700, %v699
    %v750 = vpack.c.bf16 %v702, %v701
    %v751 = vld [vmem:[%s4] sm:$0xff]
    %v752 = vld [vmem:[%s4 + $0x8] sm:$0xff]
    %v753 = vld [vmem:[%s4 + $0x10] sm:$0xff]
    %v754 = vld [vmem:[%s4 + $0x18] sm:$0xff]
    %v755 = vld [vmem:[%s4 + $0x20] sm:$0xff]
    %v756 = vld [vmem:[%s4 + $0x28] sm:$0xff]
    %v757 = vld [vmem:[%s4 + $0x30] sm:$0xff]
    %v758 = vld [vmem:[%s4 + $0x38] sm:$0xff]
    %v759 = vld [vmem:[%s4 + $0x40] sm:$0xff]
    %v760 = vld [vmem:[%s4 + $0x48] sm:$0xff]
    %v761 = vld [vmem:[%s4 + $0x50] sm:$0xff]
    %v762 = vld [vmem:[%s4 + $0x58] sm:$0xff]
    %v763 = vld [vmem:[%s4 + $0x60] sm:$0xff]
    %v764 = vld [vmem:[%s4 + $0x68] sm:$0xff]
    %v765 = vld [vmem:[%s4 + $0x70] sm:$0xff]
    %v766 = vld [vmem:[%s4 + $0x78] sm:$0xff]
    %v767 = vld [vmem:[%s4 + $0x80] sm:$0xff]
    %v768 = vld [vmem:[%s4 + $0x88] sm:$0xff]
    %v769 = vld [vmem:[%s4 + $0x90] sm:$0xff]
    %v770 = vld [vmem:[%s4 + $0x98] sm:$0xff]
    %v771 = vld [vmem:[%s4 + $0xa0] sm:$0xff]
    %v772 = vld [vmem:[%s4 + $0xa8] sm:$0xff]
    %v773 = vld [vmem:[%s4 + $0xb0] sm:$0xff]
    %v774 = vld [vmem:[%s4 + $0xb8] sm:$0xff]
    %v775 = vld [vmem:[%s4 + $0xc0] sm:$0xff]
    %v776 = vld [vmem:[%s4 + $0xc8] sm:$0xff]
    %v777 = vld [vmem:[%s4 + $0xd0] sm:$0xff]
    %v778 = vld [vmem:[%s4 + $0xd8] sm:$0xff]
    %v779 = vld [vmem:[%s4 + $0xe0] sm:$0xff]
    %v780 = vld [vmem:[%s4 + $0xe8] sm:$0xff]
    %v781 = vld [vmem:[%s4 + $0xf0] sm:$0xff]
    %v782 = vld [vmem:[%s4 + $0xf8] sm:$0xff]
    %784 = vset.pattern.permute.xlu0 0
    %785 = vperm.xlu0 %784, %v751
    %v786 = vpop.permute.xlu0 %785
    %789 = vset.pattern.permute.xlu0 0
    %790 = vperm.xlu0 %789, %v752
    %v791 = vpop.permute.xlu0 %790
    %794 = vset.pattern.permute.xlu0 0
    %795 = vperm.xlu0 %794, %v753
    %v796 = vpop.permute.xlu0 %795
    %799 = vset.pattern.permute.xlu0 0
    %800 = vperm.xlu0 %799, %v754
    %v801 = vpop.permute.xlu0 %800
    %804 = vset.pattern.permute.xlu0 0
    %805 = vperm.xlu0 %804, %v755
    %v806 = vpop.permute.xlu0 %805
    %809 = vset.pattern.permute.xlu0 0
    %810 = vperm.xlu0 %809, %v756
    %v811 = vpop.permute.xlu0 %810
    %814 = vset.pattern.permute.xlu0 0
    %815 = vperm.xlu0 %814, %v757
    %v816 = vpop.permute.xlu0 %815
    %819 = vset.pattern.permute.xlu0 0
    %820 = vperm.xlu0 %819, %v758
    %v821 = vpop.permute.xlu0 %820
    %824 = vset.pattern.permute.xlu0 0
    %825 = vperm.xlu0 %824, %v759
    %v826 = vpop.permute.xlu0 %825
    %829 = vset.pattern.permute.xlu0 0
    %830 = vperm.xlu0 %829, %v760
    %v831 = vpop.permute.xlu0 %830
    %834 = vset.pattern.permute.xlu0 0
    %835 = vperm.xlu0 %834, %v761
    %v836 = vpop.permute.xlu0 %835
    %839 = vset.pattern.permute.xlu0 0
    %840 = vperm.xlu0 %839, %v762
    %v841 = vpop.permute.xlu0 %840
    %844 = vset.pattern.permute.xlu0 0
    %845 = vperm.xlu0 %844, %v763
    %v846 = vpop.permute.xlu0 %845
    %849 = vset.pattern.permute.xlu0 0
    %850 = vperm.xlu0 %849, %v764
    %v851 = vpop.permute.xlu0 %850
    %854 = vset.pattern.permute.xlu0 0
    %855 = vperm.xlu0 %854, %v765
    %v856 = vpop.permute.xlu0 %855
    %859 = vset.pattern.permute.xlu0 0
    %860 = vperm.xlu0 %859, %v766
    %v861 = vpop.permute.xlu0 %860
    %864 = vset.pattern.permute.xlu0 0
    %865 = vperm.xlu0 %864, %v767
    %v866 = vpop.permute.xlu0 %865
    %869 = vset.pattern.permute.xlu0 0
    %870 = vperm.xlu0 %869, %v768
    %v871 = vpop.permute.xlu0 %870
    %874 = vset.pattern.permute.xlu0 0
    %875 = vperm.xlu0 %874, %v769
    %v876 = vpop.permute.xlu0 %875
    %879 = vset.pattern.permute.xlu0 0
    %880 = vperm.xlu0 %879, %v770
    %v881 = vpop.permute.xlu0 %880
    %884 = vset.pattern.permute.xlu0 0
    %885 = vperm.xlu0 %884, %v771
    %v886 = vpop.permute.xlu0 %885
    %889 = vset.pattern.permute.xlu0 0
    %890 = vperm.xlu0 %889, %v772
    %v891 = vpop.permute.xlu0 %890
    %894 = vset.pattern.permute.xlu0 0
    %895 = vperm.xlu0 %894, %v773
    %v896 = vpop.permute.xlu0 %895
    %899 = vset.pattern.permute.xlu0 0
    %900 = vperm.xlu0 %899, %v774
    %v901 = vpop.permute.xlu0 %900
    %904 = vset.pattern.permute.xlu0 0
    %905 = vperm.xlu0 %904, %v775
    %v906 = vpop.permute.xlu0 %905
    %909 = vset.pattern.permute.xlu0 0
    %910 = vperm.xlu0 %909, %v776
    %v911 = vpop.permute.xlu0 %910
    %914 = vset.pattern.permute.xlu0 0
    %915 = vperm.xlu0 %914, %v777
    %v916 = vpop.permute.xlu0 %915
    %919 = vset.pattern.permute.xlu0 0
    %920 = vperm.xlu0 %919, %v778
    %v921 = vpop.permute.xlu0 %920
    %924 = vset.pattern.permute.xlu0 0
    %925 = vperm.xlu0 %924, %v779
    %v926 = vpop.permute.xlu0 %925
    %929 = vset.pattern.permute.xlu0 0
    %930 = vperm.xlu0 %929, %v780
    %v931 = vpop.permute.xlu0 %930
    %934 = vset.pattern.permute.xlu0 0
    %935 = vperm.xlu0 %934, %v781
    %v936 = vpop.permute.xlu0 %935
    %939 = vset.pattern.permute.xlu0 0
    %940 = vperm.xlu0 %939, %v782
    %v941 = vpop.permute.xlu0 %940
    %v975 = vunpack.c.l.b16 %v703
    %v976 = vunpack.c.h.b16 %v703
    %v977 = vunpack.c.l.b16 %v704
    %v978 = vunpack.c.h.b16 %v704
    %v979 = vunpack.c.l.b16 %v705
    %v980 = vunpack.c.h.b16 %v705
    %v981 = vunpack.c.l.b16 %v706
    %v982 = vunpack.c.h.b16 %v706
    %v983 = vunpack.c.l.b16 %v707
    %v984 = vunpack.c.h.b16 %v707
    %v985 = vunpack.c.l.b16 %v708
    %v986 = vunpack.c.h.b16 %v708
    %v987 = vunpack.c.l.b16 %v709
    %v988 = vunpack.c.h.b16 %v709
    %v989 = vunpack.c.l.b16 %v710
    %v990 = vunpack.c.h.b16 %v710
    %v991 = vunpack.c.l.b16 %v711
    %v992 = vunpack.c.h.b16 %v711
    %v993 = vunpack.c.l.b16 %v712
    %v994 = vunpack.c.h.b16 %v712
    %v995 = vunpack.c.l.b16 %v713
    %v996 = vunpack.c.h.b16 %v713
    %v997 = vunpack.c.l.b16 %v714
    %v998 = vunpack.c.h.b16 %v714
    %v999 = vunpack.c.l.b16 %v715
    %v1000 = vunpack.c.h.b16 %v715
    %v1001 = vunpack.c.l.b16 %v716
    %v1002 = vunpack.c.h.b16 %v716
    %v1003 = vunpack.c.l.b16 %v717
    %v1004 = vunpack.c.h.b16 %v717
    %v1005 = vunpack.c.l.b16 %v718
    %v1006 = vunpack.c.h.b16 %v718
    %v1007 = vunpack.c.l.b16 %v719
    %v1008 = vunpack.c.h.b16 %v719
    %v1009 = vunpack.c.l.b16 %v720
    %v1010 = vunpack.c.h.b16 %v720
    %v1011 = vunpack.c.l.b16 %v721
    %v1012 = vunpack.c.h.b16 %v721
    %v1013 = vunpack.c.l.b16 %v722
    %v1014 = vunpack.c.h.b16 %v722
    %v1015 = vunpack.c.l.b16 %v723
    %v1016 = vunpack.c.h.b16 %v723
    %v1017 = vunpack.c.l.b16 %v724
    %v1018 = vunpack.c.h.b16 %v724
    %v1019 = vunpack.c.l.b16 %v725
    %v1020 = vunpack.c.h.b16 %v725
    %v1021 = vunpack.c.l.b16 %v726
    %v1022 = vunpack.c.h.b16 %v726
    %v1023 = vunpack.c.l.b16 %v727
    %v1024 = vunpack.c.h.b16 %v727
    %v1025 = vunpack.c.l.b16 %v728
    %v1026 = vunpack.c.h.b16 %v728
    %v1027 = vunpack.c.l.b16 %v729
    %v1028 = vunpack.c.h.b16 %v729
    %v1029 = vunpack.c.l.b16 %v730
    %v1030 = vunpack.c.h.b16 %v730
    %v1031 = vunpack.c.l.b16 %v731
    %v1032 = vunpack.c.h.b16 %v731
    %v1033 = vunpack.c.l.b16 %v732
    %v1034 = vunpack.c.h.b16 %v732
    %v1035 = vunpack.c.l.b16 %v733
    %v1036 = vunpack.c.h.b16 %v733
    %v1037 = vunpack.c.l.b16 %v734
    %v1038 = vunpack.c.h.b16 %v734
    %v1039 = vpack.c.b16 %v977, %v975
    %v1040 = vpack.c.b16 %v978, %v976
    %v1041 = vpack.c.b16 %v981, %v979
    %v1042 = vpack.c.b16 %v982, %v980
    %v1043 = vpack.c.b16 %v985, %v983
    %v1044 = vpack.c.b16 %v986, %v984
    %v1045 = vpack.c.b16 %v989, %v987
    %v1046 = vpack.c.b16 %v990, %v988
    %v1047 = vpack.c.b16 %v993, %v991
    %v1048 = vpack.c.b16 %v994, %v992
    %v1049 = vpack.c.b16 %v997, %v995
    %v1050 = vpack.c.b16 %v998, %v996
    %v1051 = vpack.c.b16 %v1001, %v999
    %v1052 = vpack.c.b16 %v1002, %v1000
    %v1053 = vpack.c.b16 %v1005, %v1003
    %v1054 = vpack.c.b16 %v1006, %v1004
    %v1055 = vpack.c.b16 %v1009, %v1007
    %v1056 = vpack.c.b16 %v1010, %v1008
    %v1057 = vpack.c.b16 %v1013, %v1011
    %v1058 = vpack.c.b16 %v1014, %v1012
    %v1059 = vpack.c.b16 %v1017, %v1015
    %v1060 = vpack.c.b16 %v1018, %v1016
    %v1061 = vpack.c.b16 %v1021, %v1019
    %v1062 = vpack.c.b16 %v1022, %v1020
    %v1063 = vpack.c.b16 %v1025, %v1023
    %v1064 = vpack.c.b16 %v1026, %v1024
    %v1065 = vpack.c.b16 %v1029, %v1027
    %v1066 = vpack.c.b16 %v1030, %v1028
    %v1067 = vpack.c.b16 %v1033, %v1031
    %v1068 = vpack.c.b16 %v1034, %v1032
    %v1069 = vpack.c.b16 %v1037, %v1035
    %v1070 = vpack.c.b16 %v1038, %v1036
    %1103 = vmatpush.bf16.msra.mxu0 %v742
    %1104 = vmatpush.bf16.msra.mxu0 %v741
    %1105 = vmatpush.bf16.msra.mxu0 %v740
    %1106 = vmatpush.bf16.msra.mxu0 %v739
    %1107 = vmatpush.bf16.msra.mxu0 %v738
    %1108 = vmatpush.bf16.msra.mxu0 %v737
    %1109 = vmatpush.bf16.msra.mxu0 %v736
    %1110 = vmatpush.bf16.msra.mxu0 %v735
    %1111 = vmatmul.bf16.gmra.mxu0 %v1039
    %v1112 = vpop.f32.mrf.mxu0
    %v1113 = vadd.f32 %v786, %v1112
    %v1114 = vpop.f32.mrf.mxu0
    %v1115 = vadd.f32 %v791, %v1114
    %1116 = vmatmul.bf16.gmra.mxu0 %v1041
    %v1117 = vpop.f32.mrf.mxu0
    %v1118 = vadd.f32 %v796, %v1117
    %v1119 = vpop.f32.mrf.mxu0
    %v1120 = vadd.f32 %v801, %v1119
    %1121 = vmatmul.bf16.gmra.mxu0 %v1043
    %v1122 = vpop.f32.mrf.mxu0
    %v1123 = vadd.f32 %v806, %v1122
    %v1124 = vpop.f32.mrf.mxu0
    %v1125 = vadd.f32 %v811, %v1124
    %1126 = vmatmul.bf16.gmra.mxu0 %v1045
    %v1127 = vpop.f32.mrf.mxu0
    %v1128 = vadd.f32 %v816, %v1127
    %v1129 = vpop.f32.mrf.mxu0
    %v1130 = vadd.f32 %v821, %v1129
    %1131 = vmatmul.bf16.gmra.mxu0 %v1047
    %v1132 = vpop.f32.mrf.mxu0
    %v1133 = vadd.f32 %v826, %v1132
    %v1134 = vpop.f32.mrf.mxu0
    %v1135 = vadd.f32 %v831, %v1134
    %1136 = vmatmul.bf16.gmra.mxu0 %v1049
    %v1137 = vpop.f32.mrf.mxu0
    %v1138 = vadd.f32 %v836, %v1137
    %v1139 = vpop.f32.mrf.mxu0
    %v1140 = vadd.f32 %v841, %v1139
    %1141 = vmatmul.bf16.gmra.mxu0 %v1051
    %v1142 = vpop.f32.mrf.mxu0
    %v1143 = vadd.f32 %v846, %v1142
    %v1144 = vpop.f32.mrf.mxu0
    %v1145 = vadd.f32 %v851, %v1144
    %1146 = vmatmul.bf16.gmra.mxu0 %v1053
    %v1147 = vpop.f32.mrf.mxu0
    %v1148 = vadd.f32 %v856, %v1147
    %v1149 = vpop.f32.mrf.mxu0
    %v1150 = vadd.f32 %v861, %v1149
    %1151 = vmatmul.bf16.gmra.mxu0 %v1055
    %v1152 = vpop.f32.mrf.mxu0
    %v1153 = vadd.f32 %v866, %v1152
    %v1154 = vpop.f32.mrf.mxu0
    %v1155 = vadd.f32 %v871, %v1154
    %1156 = vmatmul.bf16.gmra.mxu0 %v1057
    %v1157 = vpop.f32.mrf.mxu0
    %v1158 = vadd.f32 %v876, %v1157
    %v1159 = vpop.f32.mrf.mxu0
    %v1160 = vadd.f32 %v881, %v1159
    %1161 = vmatmul.bf16.gmra.mxu0 %v1059
    %v1162 = vpop.f32.mrf.mxu0
    %v1163 = vadd.f32 %v886, %v1162
    %v1164 = vpop.f32.mrf.mxu0
    %v1165 = vadd.f32 %v891, %v1164
    %1166 = vmatmul.bf16.gmra.mxu0 %v1061
    %v1167 = vpop.f32.mrf.mxu0
    %v1168 = vadd.f32 %v896, %v1167
    %v1169 = vpop.f32.mrf.mxu0
    %v1170 = vadd.f32 %v901, %v1169
    %1171 = vmatmul.bf16.gmra.mxu0 %v1063
    %v1172 = vpop.f32.mrf.mxu0
    %v1173 = vadd.f32 %v906, %v1172
    %v1174 = vpop.f32.mrf.mxu0
    %v1175 = vadd.f32 %v911, %v1174
    %1176 = vmatmul.bf16.gmra.mxu0 %v1065
    %v1177 = vpop.f32.mrf.mxu0
    %v1178 = vadd.f32 %v916, %v1177
    %v1179 = vpop.f32.mrf.mxu0
    %v1180 = vadd.f32 %v921, %v1179
    %1181 = vmatmul.bf16.gmra.mxu0 %v1067
    %v1182 = vpop.f32.mrf.mxu0
    %v1183 = vadd.f32 %v926, %v1182
    %v1184 = vpop.f32.mrf.mxu0
    %v1185 = vadd.f32 %v931, %v1184
    %1186 = vmatmul.bf16.gmra.mxu0 %v1069
    %v1187 = vpop.f32.mrf.mxu0
    %v1188 = vadd.f32 %v936, %v1187
    %v1189 = vpop.f32.mrf.mxu0
    %v1190 = vadd.f32 %v941, %v1189
    %1191 = vdwg.mxu0
    %1192 = vmatpush.bf16.msra.mxu0 %v750
    %1193 = vmatpush.bf16.msra.mxu0 %v749
    %1194 = vmatpush.bf16.msra.mxu0 %v748
    %1195 = vmatpush.bf16.msra.mxu0 %v747
    %1196 = vmatpush.bf16.msra.mxu0 %v746
    %1197 = vmatpush.bf16.msra.mxu0 %v745
    %1198 = vmatpush.bf16.msra.mxu0 %v744
    %1199 = vmatpush.bf16.msra.mxu0 %v743
    %1200 = vmatmul.bf16.gmra.mxu0 %v1040
    %v1201 = vpop.f32.mrf.mxu0
    %v1202 = vadd.f32 %v1113, %v1201
    %v1203 = vpop.f32.mrf.mxu0
    %v1204 = vadd.f32 %v1115, %v1203
    %1205 = vmatmul.bf16.gmra.mxu0 %v1042
    %v1206 = vpop.f32.mrf.mxu0
    %v1207 = vadd.f32 %v1118, %v1206
    %v1208 = vpop.f32.mrf.mxu0
    %v1209 = vadd.f32 %v1120, %v1208
    %1210 = vmatmul.bf16.gmra.mxu0 %v1044
    %v1211 = vpop.f32.mrf.mxu0
    %v1212 = vadd.f32 %v1123, %v1211
    %v1213 = vpop.f32.mrf.mxu0
    %v1214 = vadd.f32 %v1125, %v1213
    %1215 = vmatmul.bf16.gmra.mxu0 %v1046
    %v1216 = vpop.f32.mrf.mxu0
    %v1217 = vadd.f32 %v1128, %v1216
    %v1218 = vpop.f32.mrf.mxu0
    %v1219 = vadd.f32 %v1130, %v1218
    %1220 = vmatmul.bf16.gmra.mxu0 %v1048
    %v1221 = vpop.f32.mrf.mxu0
    %v1222 = vadd.f32 %v1133, %v1221
    %v1223 = vpop.f32.mrf.mxu0
    %v1224 = vadd.f32 %v1135, %v1223
    %1225 = vmatmul.bf16.gmra.mxu0 %v1050
    %v1226 = vpop.f32.mrf.mxu0
    %v1227 = vadd.f32 %v1138, %v1226
    %v1228 = vpop.f32.mrf.mxu0
    %v1229 = vadd.f32 %v1140, %v1228
    %1230 = vmatmul.bf16.gmra.mxu0 %v1052
    %v1231 = vpop.f32.mrf.mxu0
    %v1232 = vadd.f32 %v1143, %v1231
    %v1233 = vpop.f32.mrf.mxu0
    %v1234 = vadd.f32 %v1145, %v1233
    %1235 = vmatmul.bf16.gmra.mxu0 %v1054
    %v1236 = vpop.f32.mrf.mxu0
    %v1237 = vadd.f32 %v1148, %v1236
    %v1238 = vpop.f32.mrf.mxu0
    %v1239 = vadd.f32 %v1150, %v1238
    %1240 = vmatmul.bf16.gmra.mxu0 %v1056
    %v1241 = vpop.f32.mrf.mxu0
    %v1242 = vadd.f32 %v1153, %v1241
    %v1243 = vpop.f32.mrf.mxu0
    %v1244 = vadd.f32 %v1155, %v1243
    %1245 = vmatmul.bf16.gmra.mxu0 %v1058
    %v1246 = vpop.f32.mrf.mxu0
    %v1247 = vadd.f32 %v1158, %v1246
    %v1248 = vpop.f32.mrf.mxu0
    %v1249 = vadd.f32 %v1160, %v1248
    %1250 = vmatmul.bf16.gmra.mxu0 %v1060
    %v1251 = vpop.f32.mrf.mxu0
    %v1252 = vadd.f32 %v1163, %v1251
    %v1253 = vpop.f32.mrf.mxu0
    %v1254 = vadd.f32 %v1165, %v1253
    %1255 = vmatmul.bf16.gmra.mxu0 %v1062
    %v1256 = vpop.f32.mrf.mxu0
    %v1257 = vadd.f32 %v1168, %v1256
    %v1258 = vpop.f32.mrf.mxu0
    %v1259 = vadd.f32 %v1170, %v1258
    %1260 = vmatmul.bf16.gmra.mxu0 %v1064
    %v1261 = vpop.f32.mrf.mxu0
    %v1262 = vadd.f32 %v1173, %v1261
    %v1263 = vpop.f32.mrf.mxu0
    %v1264 = vadd.f32 %v1175, %v1263
    %1265 = vmatmul.bf16.gmra.mxu0 %v1066
    %v1266 = vpop.f32.mrf.mxu0
    %v1267 = vadd.f32 %v1178, %v1266
    %v1268 = vpop.f32.mrf.mxu0
    %v1269 = vadd.f32 %v1180, %v1268
    %1270 = vmatmul.bf16.gmra.mxu0 %v1068
    %v1271 = vpop.f32.mrf.mxu0
    %v1272 = vadd.f32 %v1183, %v1271
    %v1273 = vpop.f32.mrf.mxu0
    %v1274 = vadd.f32 %v1185, %v1273
    %1275 = vmatmul.bf16.gmra.mxu0 %v1070
    %v1276 = vpop.f32.mrf.mxu0
    %v1277 = vadd.f32 %v1188, %v1276
    %v1278 = vpop.f32.mrf.mxu0
    %v1279 = vadd.f32 %v1190, %v1278
    %1280 = vdwg.mxu0
    %v1281 = vtanh.pop %v1202
    %v1282 = vtanh.pop %v1204
    %v1283 = vtanh.pop %v1207
    %v1284 = vtanh.pop %v1209
    %v1285 = vtanh.pop %v1212
    %v1286 = vtanh.pop %v1214
    %v1287 = vtanh.pop %v1217
    %v1288 = vtanh.pop %v1219
    %v1289 = vtanh.pop %v1222
    %v1290 = vtanh.pop %v1224
    %v1291 = vtanh.pop %v1227
    %v1292 = vtanh.pop %v1229
    %v1293 = vtanh.pop %v1232
    %v1294 = vtanh.pop %v1234
    %v1295 = vtanh.pop %v1237
    %v1296 = vtanh.pop %v1239
    %v1297 = vtanh.pop %v1242
    %v1298 = vtanh.pop %v1244
    %v1299 = vtanh.pop %v1247
    %v1300 = vtanh.pop %v1249
    %v1301 = vtanh.pop %v1252
    %v1302 = vtanh.pop %v1254
    %v1303 = vtanh.pop %v1257
    %v1304 = vtanh.pop %v1259
    %v1305 = vtanh.pop %v1262
    %v1306 = vtanh.pop %v1264
    %v1307 = vtanh.pop %v1267
    %v1308 = vtanh.pop %v1269
    %v1309 = vtanh.pop %v1272
    %v1310 = vtanh.pop %v1274
    %v1311 = vtanh.pop %v1277
    %v1312 = vtanh.pop %v1279
    %v1313 = vld [vmem:[%s5] sm:$0x3]
    %v1314 = vpack.c.bf16 %v1282, %v1281
    %v1315 = vpack.c.bf16 %v1284, %v1283
    %v1316 = vpack.c.bf16 %v1286, %v1285
    %v1317 = vpack.c.bf16 %v1288, %v1287
    %v1318 = vpack.c.bf16 %v1290, %v1289
    %v1319 = vpack.c.bf16 %v1292, %v1291
    %v1320 = vpack.c.bf16 %v1294, %v1293
    %v1321 = vpack.c.bf16 %v1296, %v1295
    %v1322 = vpack.c.bf16 %v1298, %v1297
    %v1323 = vpack.c.bf16 %v1300, %v1299
    %v1324 = vpack.c.bf16 %v1302, %v1301
    %v1325 = vpack.c.bf16 %v1304, %v1303
    %v1326 = vpack.c.bf16 %v1306, %v1305
    %v1327 = vpack.c.bf16 %v1308, %v1307
    %v1328 = vpack.c.bf16 %v1310, %v1309
    %v1329 = vpack.c.bf16 %v1312, %v1311
    %s1330 = sld [smem:[#allocation2]]
    %v1331 = vstv %s1330
    %1333 = vst [vmem:[#allocation1] ss:$9 sm:$0xff] %v1313
    %v1334 = vld [vmem:[#allocation1] sm:$0xff]
    %v1335 = vld [vmem:[#allocation1 + $0x9] sm:$0xff]
    %1338 = vmatpush.bf16.msra.mxu0 %v1321
    %1339 = vmatpush.bf16.msra.mxu0 %v1320
    %1340 = vmatpush.bf16.msra.mxu0 %v1319
    %1341 = vmatpush.bf16.msra.mxu0 %v1318
    %1342 = vmatpush.bf16.msra.mxu0 %v1317
    %1343 = vmatpush.bf16.msra.mxu0 %v1316
    %1344 = vmatpush.bf16.msra.mxu0 %v1315
    %1345 = vmatpush.bf16.msra.mxu0 %v1314
    %1346 = vmatmul.bf16.gmra.mxu0 %v1334
    %v1347 = vpop.f32.mrf.mxu0
    %v1348 = vadd.f32 %v1331, %v1347
    %v1349 = vpop.f32.mrf.mxu0
    %1350 = vdwg.mxu0
    %1351 = vmatpush.bf16.msra.mxu0 %v1329
    %1352 = vmatpush.bf16.msra.mxu0 %v1328
    %1353 = vmatpush.bf16.msra.mxu0 %v1327
    %1354 = vmatpush.bf16.msra.mxu0 %v1326
    %1355 = vmatpush.bf16.msra.mxu0 %v1325
    %1356 = vmatpush.bf16.msra.mxu0 %v1324
    %1357 = vmatpush.bf16.msra.mxu0 %v1323
    %1358 = vmatpush.bf16.msra.mxu0 %v1322
    %1359 = vmatmul.bf16.gmra.mxu0 %v1335
    %v1360 = vpop.f32.mrf.mxu0
    %v1361 = vadd.f32 %v1348, %v1360
    %v1362 = vpop.f32.mrf.mxu0
    %1363 = vdwg.mxu0
    %1364 = vst [vmem:[#allocation3] sm:$0x1] %v1361
    // Predicated region
    $region30: #{tpu_custom_call.1} parent=1 // pred_check
      _
    $region31: #{tpu_custom_call.1} parent=1 // pred_check_branch
      %1366 = sbr.rel (0) target = $region33
    $region32: #{tpu_custom_call.1} parent=1 // pred_region
      %1368 = vsyncadd [#allocation4], 0
      %s1370 = sshll.u32 [#allocation3], 4
      %s1371 = int_to_ptr.vmem [resolvable:$true] %s1370
      %s1372 = sshll.u32 %s7, 4
      %s1373 = int_to_ptr.hbm [resolvable:$true] %s1372
      %1375 = dma.vmem_to_hbm [thread:$0]  %s1371, 16, %s1373, [#allocation4]
    $region33: #{tpu_custom_call.1} parent=1 // pred_fallthru
      _
    // Predicated region
    $region34: #{tpu_custom_call.1} parent=1 // pred_check
      _
    $region35: #{tpu_custom_call.1} parent=1 // pred_check_branch
      %1377 = sbr.rel (0) target = $region37
    $region36: #{tpu_custom_call.1} parent=1 // pred_region
      %1379 = dma.done [#allocation4], 16
    $region37: #{tpu_custom_call.1} parent=1 // pred_fallthru
      _
    %1380 = vsyncpa [#allocation4], 1

</llo_original>
